<compile_context>
chip_gen: v5e
topology: v5e:2x2
jax: 0.10.0
libtpu: 0.0.40
codegen_flags: <defaults>
</compile_context>

<pallas_src>
import functools

import jax
import jax.numpy as jnp
from jax import lax
from jax.experimental import pallas as pl
from jax.experimental.pallas import tpu as pltpu

_BN_EPS = 1e-5


def _shift_left(v, s):
    """Rotate the last (lane) axis left by static `s`: out[..., i] = v[..., i+s mod w].

    Built from two contiguous lane slices + a concatenate (all natively
    supported ops, direction-unambiguous).  Wrapped-around values only ever
    land in positions the caller discards."""
    return jnp.concatenate([v[..., s:], v[..., :s]], axis=-1)


def _down_kernel(gb_ref, x_ref, o_ref, *, eps):
    # gb_ref : VMEM (2, cb, 1, 1) f32   -- stacked [gamma; beta]
    # x_ref  : VMEM (n, cb, ho, 2*W)    -- rows 2h and 2h+1 concatenated on lanes
    # o_ref  : VMEM (n, cb, ho, wo)
    n, cb, ho, w2 = x_ref.shape
    w = w2 // 2            # original width W
    wo = w // 2            # pooled width

    # ---- MaxPool2d(2,2), step 1: row pairs ---------------------------------
    # The two lane halves of the block are rows 2h and 2h+1, so the row-pair
    # max is a single elementwise max of two contiguous slices (input dtype).
    a = jnp.maximum(x_ref[:, :, :, pl.ds(0, w)], x_ref[:, :, :, pl.ds(w, w)])

    # ---- MaxPool2d(2,2), step 2: column pairs ------------------------------
    # c[..., 2j] = max(a[..., 2j], a[..., 2j+1]); odd lanes hold junk.
    c = jnp.maximum(a, _shift_left(a, 1))

    # Compact the even lanes to the front with log2(wo) shift+select steps so
    # everything stays lane-dense (no strided lane access, no relayout copy).
    lane = lax.broadcasted_iota(jnp.int32, (1, 1, 1, w), 3)
    d = c
    s = 1
    while 2 * s < w:
        lm = lane & (4 * s - 1)                     # lane mod 4s (4s = 2^k)
        mask = (lm >= s) & (lm < 2 * s)
        d = jnp.where(mask, _shift_left(d, s), d)
        s *= 2
    pooled = d[..., :wo].astype(jnp.float32)        # (n, cb, ho, wo) f32

    # ---- BatchNorm2d: training-mode batch stats (biased variance) ----------
    inv_cnt = 1.0 / float(n * ho * wo)
    total = (pooled.sum(axis=3, keepdims=True)
                   .sum(axis=2, keepdims=True)
                   .sum(axis=0, keepdims=True))
    mean = total * inv_cnt                          # (1, cb, 1, 1)
    centered = pooled - mean
    ss = ((centered * centered).sum(axis=3, keepdims=True)
                               .sum(axis=2, keepdims=True)
                               .sum(axis=0, keepdims=True))
    var = ss * inv_cnt                              # (1, cb, 1, 1)

    # ---- affine folded into one FMA, then ReLU ------------------------------
    gb = gb_ref[...]                                # (2, cb, 1, 1)
    scale = gb[0:1] * lax.rsqrt(var + eps)          # gamma * rsqrt(var + eps)
    y = jnp.maximum(centered * scale + gb[1:2], 0.0)
    o_ref[...] = y.astype(o_ref.dtype)


def _vmem_config():
    """(per-step input-block budget, scoped VMEM limit), tuned per generation."""
    try:
        vmem_bytes = pltpu.get_tpu_info().vmem_capacity_bytes
    except Exception:
        vmem_bytes = 64 * 1024 * 1024               # conservative (v7x-safe)
    if vmem_bytes >= 100 * 1024 * 1024:             # v5e / v6e: 128 MiB VMEM
        return 16 * 1024 * 1024, 96 * 1024 * 1024
    # v7x: 64 MiB VMEM -- keep blocks large (grid-step-overhead bound at
    # 3.2 TB/s) but leave room for double-buffered in/out + intermediates.
    return 8 * 1024 * 1024, 56 * 1024 * 1024


def _pick_channel_tile(C, bytes_per_channel, budget):
    """Largest channel-tile (divisor of C) fitting the budget, capped so the
    grid has >= 2 steps (lets v7x shard the 'parallel' axis across its 2 TCs)."""
    cap = max(1, C // 2)
    fitting = [d for d in range(1, cap + 1)
               if C % d == 0 and d * bytes_per_channel <= budget]
    if not fitting:
        # TODO(synk): add a spatial (Ho-tile) grid axis with two-pass stats when
        # even a single channel slab exceeds the VMEM budget (very large N*H*W).
        return 1
    return max(fitting)


def down_forward(x, gamma, beta, eps=_BN_EPS):
    """Fused MaxPool2d(2,2) + BatchNorm2d (train-mode stats) + ReLU.

    x: (N, C, H, W); returns (N, C, H//2, W//2) in x.dtype.
    NOTE: running_mean/running_var buffer updates of nn.BatchNorm2d are not
    reproduced; only the forward output is."""
    N, C, H, W = x.shape
    assert H % 2 == 0 and W % 2 == 0, "MaxPool2d(2,2) path expects even H, W"
    Ho, Wo = H // 2, W // 2

    budget, vmem_limit = _vmem_config()
    bytes_per_channel = N * H * W * x.dtype.itemsize
    cb = _pick_channel_tile(C, bytes_per_channel, budget)
    grid = (C // cb,)

    # gamma/beta stacked into one tiny block -> a single side DMA per grid step.
    gb = jnp.stack([gamma, beta]).reshape(2, C, 1, 1).astype(jnp.float32)

    # Free contiguous reshape: each output row's two source rows (2h, 2h+1) end
    # up concatenated along the lane (last) dim.
    x_in = x.reshape(N, C, Ho, 2 * W)

    out = pl.pallas_call(
        functools.partial(_down_kernel, eps=eps),
        out_shape=jax.ShapeDtypeStruct((N, C, Ho, Wo), x.dtype),
        grid_spec=pltpu.PrefetchScalarGridSpec(
            num_scalar_prefetch=0,
            grid=grid,
            in_specs=[
                pl.BlockSpec((2, cb, 1, 1), lambda c: (0, c, 0, 0)),
                pl.BlockSpec((N, cb, Ho, 2 * W), lambda c: (0, c, 0, 0)),
            ],
            out_specs=pl.BlockSpec((N, cb, Ho, Wo), lambda c: (0, c, 0, 0)),
        ),
        compiler_params=pltpu.CompilerParams(
            dimension_semantics=("parallel",),
            vmem_limit_bytes=vmem_limit,
        ),
    )(gb, x_in)
    # NOTE: for small Ho*Wo (< 128) the writeback is lane-masked; a fully
    # lane-dense out_spec would require a cross-batch stats scratch + pl.when
    # finalize restructure, which is not worth it for this module.
    return out


def _reference(x, gamma, beta, eps=_BN_EPS):
    N, C, H, W = x.shape
    Ho, Wo = H // 2, W // 2
    pooled = x.reshape(N, C, Ho, 2, Wo, 2).max(axis=(3, 5))
    mean = pooled.mean(axis=(0, 2, 3), keepdims=True)
    var = jnp.square(pooled - mean).mean(axis=(0, 2, 3), keepdims=True)
    y = (pooled - mean) / jnp.sqrt(var + eps)
    y = y * gamma[None, :, None, None] + beta[None, :, None, None]
    return jnp.maximum(y, 0.0)


if __name__ == "__main__":
    key = jax.random.PRNGKey(0)
    N, C, H, W = 2, 4, 16, 16
    x = jax.random.normal(key, (N, C, H, W), dtype=jnp.float32)

    # BatchNorm2d affine params at PyTorch default init (weight=1, bias=0).
    gamma = jnp.ones((C,), dtype=jnp.float32)
    beta = jnp.zeros((C,), dtype=jnp.float32)

    out = jax.block_until_ready(down_forward(x, gamma, beta))

    ref = _reference(x, gamma, beta)
    assert out.shape == (N, C, H // 2, W // 2)
    assert jnp.allclose(out, ref, rtol=1e-5, atol=1e-5), float(
        jnp.max(jnp.abs(out - ref)))

    print("KERNEL_OK")
</pallas_src>

<mosaic_0001>
module attributes {stable_mosaic.version = 11 : i64} {
  func.func @_down_kernel(%arg0: i32, %arg1: memref<2x2x1x1xf32, #tpu.memory_space<vmem>>, %arg2: memref<2x2x8x32xf32, #tpu.memory_space<vmem>>, %arg3: memref<2x2x8x8xf32, #tpu.memory_space<vmem>>) attributes {dimension_semantics = [#tpu.dimension_semantics<parallel>], iteration_bounds = array<i64: 2>, scalar_prefetch = 0 : i64, scratch_operands = 0 : i64, tpu.core_type = #tpu.core_type<tc>, window_params = [{transform_indices = @transform_0, window_bounds = array<i64: 2, 2, 1, 1>}, {transform_indices = @transform_1, window_bounds = array<i64: 2, 2, 8, 32>}, {transform_indices = @transform_2, window_bounds = array<i64: 2, 2, 8, 8>}]} {
    %c0 = arith.constant 0 : index
    %c0_0 = arith.constant 0 : index
    %c0_1 = arith.constant 0 : index
    %c0_2 = arith.constant 0 : index
    %0 = vector.load %arg2[%c0, %c0_0, %c0_1, %c0_2] : memref<2x2x8x32xf32, #tpu.memory_space<vmem>>, vector<2x2x8x16xf32>
    %c0_3 = arith.constant 0 : index
    %c0_4 = arith.constant 0 : index
    %c0_5 = arith.constant 0 : index
    %c16 = arith.constant 16 : index
    %1 = vector.load %arg2[%c0_3, %c0_4, %c0_5, %c16] : memref<2x2x8x32xf32, #tpu.memory_space<vmem>>, vector<2x2x8x16xf32>
    %2 = arith.maximumf %0, %1 : vector<2x2x8x16xf32>
    %3 = vector.extract_strided_slice %2 {offsets = [0, 0, 0, 1], sizes = [2, 2, 8, 15], strides = [1, 1, 1, 1]} : vector<2x2x8x16xf32> to vector<2x2x8x15xf32>
    %4 = vector.extract_strided_slice %2 {offsets = [0, 0, 0, 0], sizes = [2, 2, 8, 1], strides = [1, 1, 1, 1]} : vector<2x2x8x16xf32> to vector<2x2x8x1xf32>
    %5 = tpu.concatenate %3, %4 in 3 : vector<2x2x8x15xf32>, vector<2x2x8x1xf32> -> vector<2x2x8x16xf32>
    %6 = arith.maximumf %2, %5 : vector<2x2x8x16xf32>
    %7 = tpu.iota {dimensions = array<i32: 3>} : vector<1x1x1x16xi32>
    %c3_i32 = arith.constant 3 : i32
    %8 = vector.broadcast %c3_i32 : i32 to vector<1x1x1x16xi32>
    %9 = arith.andi %7, %8 : vector<1x1x1x16xi32>
    %c1_i32 = arith.constant 1 : i32
    %10 = vector.broadcast %c1_i32 : i32 to vector<1x1x1x16xi32>
    %11 = arith.cmpi sge, %9, %10 : vector<1x1x1x16xi32>
    %c2_i32 = arith.constant 2 : i32
    %12 = vector.broadcast %c2_i32 : i32 to vector<1x1x1x16xi32>
    %13 = arith.cmpi slt, %9, %12 : vector<1x1x1x16xi32>
    %14 = arith.andi %11, %13 : vector<1x1x1x16xi1>
    %15 = vector.extract_strided_slice %6 {offsets = [0, 0, 0, 1], sizes = [2, 2, 8, 15], strides = [1, 1, 1, 1]} : vector<2x2x8x16xf32> to vector<2x2x8x15xf32>
    %16 = vector.extract_strided_slice %6 {offsets = [0, 0, 0, 0], sizes = [2, 2, 8, 1], strides = [1, 1, 1, 1]} : vector<2x2x8x16xf32> to vector<2x2x8x1xf32>
    %17 = tpu.concatenate %15, %16 in 3 : vector<2x2x8x15xf32>, vector<2x2x8x1xf32> -> vector<2x2x8x16xf32>
    %18 = vector.shape_cast %14 : vector<1x1x1x16xi1> to vector<1x1x1x16xi1>
    %19 = vector.broadcast %18 : vector<1x1x1x16xi1> to vector<2x2x8x16xi1>
    %20 = arith.select %19, %17, %6 : vector<2x2x8x16xi1>, vector<2x2x8x16xf32>
    %c7_i32 = arith.constant 7 : i32
    %21 = vector.broadcast %c7_i32 : i32 to vector<1x1x1x16xi32>
    %22 = arith.andi %7, %21 : vector<1x1x1x16xi32>
    %c2_i32_6 = arith.constant 2 : i32
    %23 = vector.broadcast %c2_i32_6 : i32 to vector<1x1x1x16xi32>
    %24 = arith.cmpi sge, %22, %23 : vector<1x1x1x16xi32>
    %c4_i32 = arith.constant 4 : i32
    %25 = vector.broadcast %c4_i32 : i32 to vector<1x1x1x16xi32>
    %26 = arith.cmpi slt, %22, %25 : vector<1x1x1x16xi32>
    %27 = arith.andi %24, %26 : vector<1x1x1x16xi1>
    %28 = vector.extract_strided_slice %20 {offsets = [0, 0, 0, 2], sizes = [2, 2, 8, 14], strides = [1, 1, 1, 1]} : vector<2x2x8x16xf32> to vector<2x2x8x14xf32>
    %29 = vector.extract_strided_slice %20 {offsets = [0, 0, 0, 0], sizes = [2, 2, 8, 2], strides = [1, 1, 1, 1]} : vector<2x2x8x16xf32> to vector<2x2x8x2xf32>
    %30 = tpu.concatenate %28, %29 in 3 : vector<2x2x8x14xf32>, vector<2x2x8x2xf32> -> vector<2x2x8x16xf32>
    %31 = vector.shape_cast %27 : vector<1x1x1x16xi1> to vector<1x1x1x16xi1>
    %32 = vector.broadcast %31 : vector<1x1x1x16xi1> to vector<2x2x8x16xi1>
    %33 = arith.select %32, %30, %20 : vector<2x2x8x16xi1>, vector<2x2x8x16xf32>
    %c15_i32 = arith.constant 15 : i32
    %34 = vector.broadcast %c15_i32 : i32 to vector<1x1x1x16xi32>
    %35 = arith.andi %7, %34 : vector<1x1x1x16xi32>
    %c4_i32_7 = arith.constant 4 : i32
    %36 = vector.broadcast %c4_i32_7 : i32 to vector<1x1x1x16xi32>
    %37 = arith.cmpi sge, %35, %36 : vector<1x1x1x16xi32>
    %c8_i32 = arith.constant 8 : i32
    %38 = vector.broadcast %c8_i32 : i32 to vector<1x1x1x16xi32>
    %39 = arith.cmpi slt, %35, %38 : vector<1x1x1x16xi32>
    %40 = arith.andi %37, %39 : vector<1x1x1x16xi1>
    %41 = vector.extract_strided_slice %33 {offsets = [0, 0, 0, 4], sizes = [2, 2, 8, 12], strides = [1, 1, 1, 1]} : vector<2x2x8x16xf32> to vector<2x2x8x12xf32>
    %42 = vector.extract_strided_slice %33 {offsets = [0, 0, 0, 0], sizes = [2, 2, 8, 4], strides = [1, 1, 1, 1]} : vector<2x2x8x16xf32> to vector<2x2x8x4xf32>
    %43 = tpu.concatenate %41, %42 in 3 : vector<2x2x8x12xf32>, vector<2x2x8x4xf32> -> vector<2x2x8x16xf32>
    %44 = vector.shape_cast %40 : vector<1x1x1x16xi1> to vector<1x1x1x16xi1>
    %45 = vector.broadcast %44 : vector<1x1x1x16xi1> to vector<2x2x8x16xi1>
    %46 = arith.select %45, %43, %33 : vector<2x2x8x16xi1>, vector<2x2x8x16xf32>
    %47 = vector.extract_strided_slice %46 {offsets = [0, 0, 0, 0], sizes = [2, 2, 8, 8], strides = [1, 1, 1, 1]} : vector<2x2x8x16xf32> to vector<2x2x8x8xf32>
    %cst = arith.constant dense<0.000000e+00> : vector<2x2x8xf32>
    %48 = vector.multi_reduction <add>, %47, %cst [3] : vector<2x2x8x8xf32> to vector<2x2x8xf32>
    %49 = vector.shape_cast %48 : vector<2x2x8xf32> to vector<2x2x8x1xf32>
    %cst_8 = arith.constant dense<0.000000e+00> : vector<2x2x1xf32>
    %50 = vector.multi_reduction <add>, %49, %cst_8 [2] : vector<2x2x8x1xf32> to vector<2x2x1xf32>
    %51 = vector.shape_cast %50 : vector<2x2x1xf32> to vector<2x2x1x1xf32>
    %cst_9 = arith.constant dense<0.000000e+00> : vector<2x1x1xf32>
    %52 = vector.multi_reduction <add>, %51, %cst_9 [0] : vector<2x2x1x1xf32> to vector<2x1x1xf32>
    %53 = vector.shape_cast %52 : vector<2x1x1xf32> to vector<1x2x1x1xf32>
    %cst_10 = arith.constant 7.812500e-03 : f32
    %54 = vector.broadcast %cst_10 : f32 to vector<1x2x1x1xf32>
    %55 = arith.mulf %53, %54 : vector<1x2x1x1xf32>
    %56 = vector.broadcast %55 : vector<1x2x1x1xf32> to vector<2x2x8x8xf32>
    %57 = arith.subf %47, %56 : vector<2x2x8x8xf32>
    %58 = arith.mulf %57, %57 : vector<2x2x8x8xf32>
    %cst_11 = arith.constant dense<0.000000e+00> : vector<2x2x8xf32>
    %59 = vector.multi_reduction <add>, %58, %cst_11 [3] : vector<2x2x8x8xf32> to vector<2x2x8xf32>
    %60 = vector.shape_cast %59 : vector<2x2x8xf32> to vector<2x2x8x1xf32>
    %cst_12 = arith.constant dense<0.000000e+00> : vector<2x2x1xf32>
    %61 = vector.multi_reduction <add>, %60, %cst_12 [2] : vector<2x2x8x1xf32> to vector<2x2x1xf32>
    %62 = vector.shape_cast %61 : vector<2x2x1xf32> to vector<2x2x1x1xf32>
    %cst_13 = arith.constant dense<0.000000e+00> : vector<2x1x1xf32>
    %63 = vector.multi_reduction <add>, %62, %cst_13 [0] : vector<2x2x1x1xf32> to vector<2x1x1xf32>
    %64 = vector.shape_cast %63 : vector<2x1x1xf32> to vector<1x2x1x1xf32>
    %cst_14 = arith.constant 7.812500e-03 : f32
    %65 = vector.broadcast %cst_14 : f32 to vector<1x2x1x1xf32>
    %66 = arith.mulf %64, %65 : vector<1x2x1x1xf32>
    %c0_15 = arith.constant 0 : index
    %c0_16 = arith.constant 0 : index
    %c0_17 = arith.constant 0 : index
    %c0_18 = arith.constant 0 : index
    %67 = vector.load %arg1[%c0_15, %c0_16, %c0_17, %c0_18] : memref<2x2x1x1xf32, #tpu.memory_space<vmem>>, vector<2x2x1x1xf32>
    %68 = vector.extract_strided_slice %67 {offsets = [0, 0, 0, 0], sizes = [1, 2, 1, 1], strides = [1, 1, 1, 1]} : vector<2x2x1x1xf32> to vector<1x2x1x1xf32>
    %cst_19 = arith.constant 9.99999974E-6 : f32
    %69 = vector.broadcast %cst_19 : f32 to vector<1x2x1x1xf32>
    %70 = arith.addf %66, %69 : vector<1x2x1x1xf32>
    %71 = math.rsqrt %70 : vector<1x2x1x1xf32>
    %72 = arith.mulf %68, %71 : vector<1x2x1x1xf32>
    %73 = vector.broadcast %72 : vector<1x2x1x1xf32> to vector<2x2x8x8xf32>
    %74 = arith.mulf %57, %73 : vector<2x2x8x8xf32>
    %75 = vector.extract_strided_slice %67 {offsets = [1, 0, 0, 0], sizes = [1, 2, 1, 1], strides = [1, 1, 1, 1]} : vector<2x2x1x1xf32> to vector<1x2x1x1xf32>
    %76 = vector.broadcast %75 : vector<1x2x1x1xf32> to vector<2x2x8x8xf32>
    %77 = arith.addf %74, %76 : vector<2x2x8x8xf32>
    %cst_20 = arith.constant 0.000000e+00 : f32
    %78 = vector.broadcast %cst_20 : f32 to vector<2x2x8x8xf32>
    %79 = arith.maximumf %77, %78 : vector<2x2x8x8xf32>
    %c0_21 = arith.constant 0 : index
    %c0_22 = arith.constant 0 : index
    %c0_23 = arith.constant 0 : index
    %c0_24 = arith.constant 0 : index
    %80 = vector.load %arg3[%c0_21, %c0_22, %c0_23, %c0_24] : memref<2x2x8x8xf32, #tpu.memory_space<vmem>>, vector<2x2x8x8xf32>
    tpu.vector_store %arg3[%c0_21, %c0_22, %c0_23, %c0_24], %79 {strides = array<i32>} : memref<2x2x8x8xf32, #tpu.memory_space<vmem>>, vector<2x2x8x8xf32>,
    return
  }
  func.func @transform_0(%arg0: i32) -> (i32, i32, i32, i32) {
    %c0_i32 = arith.constant 0 : i32
    %c0_i32_0 = arith.constant 0 : i32
    %c0_i32_1 = arith.constant 0 : i32
    %c0_i32_2 = arith.constant 0 : i32
    return %c0_i32, %arg0, %c0_i32_0, %c0_i32_1 : i32, i32, i32, i32
  }
  func.func @transform_1(%arg0: i32) -> (i32, i32, i32, i32) {
    %c0_i32 = arith.constant 0 : i32
    %c0_i32_0 = arith.constant 0 : i32
    %c0_i32_1 = arith.constant 0 : i32
    %c0_i32_2 = arith.constant 0 : i32
    return %c0_i32, %arg0, %c0_i32_0, %c0_i32_1 : i32, i32, i32, i32
  }
  func.func @transform_2(%arg0: i32) -> (i32, i32, i32, i32) {
    %c0_i32 = arith.constant 0 : i32
    %c0_i32_0 = arith.constant 0 : i32
    %c0_i32_1 = arith.constant 0 : i32
    %c0_i32_2 = arith.constant 0 : i32
    return %c0_i32, %arg0, %c0_i32_0, %c0_i32_1 : i32, i32, i32, i32
  }
}

</mosaic_0001>

<llo_original>
// kernel: tpu_custom_call.1
$region0: #{tpu_custom_call.1}
  #allocation0 [shape = 'u32[]', space=smem, size = 0x4, offset = 0x4, fixed_abs, tag = 'smem constant byte address 0x4 - core index']
  #allocation1 [shape = 'u32[72,128]{1,0:T(1,128)}', space=vmem, size = 0x9000, scoped, tag = 'internal scratch']
  #allocation7 [shape = 's32[]', space=sflag, size = 0x4, offset = 0, fixed_abs, tag = 'sflag constant byte address 0x0 - dummy sync flag']
  #allocation9 [shape = 's32[]', space=sflag, size = 0x4, offset = 0, fixed_abs, tag = 'sflag constant byte address 0x0 - dummy sync flag']
  %s0 = inlined_call_operand.vmem [shape: f32[2,4,1,1], index: 0, kind: input, shape index: {}]
  %s1 = inlined_call_operand.hbm [shape: f32[2,4,8,32], index: 1, kind: input, shape index: {}]
  %s2 = inlined_call_operand.hbm [shape: f32[2,4,8,8], index: 2, kind: output, shape index: {}]
  %s3 = sld [smem:[#allocation0]]
  $region79: #{tpu_custom_call.1} parent=0
    _
  %s5 = ssub.s32 1, %s3
  %s6 = scalar_select 0, %s5, %s3
  $region1: #{tpu_custom_call.1} parent=0
    #allocation2 [shape = 'u8[4096]{0}', space=vmem, size = 0x1000, scoped, tag = 'input window, operand 0']
    #allocation3 [shape = 'u8[32768]{0}', space=vmem, size = 0x8000, scoped, tag = 'input window, operand 1']
    #allocation4 [shape = 's32[2]{0}', space=sflag, size = 0x8, scoped, tag = 'scoped memory for tpu_custom_call.1']
    #allocation5 [shape = 's32[2]{0}', space=sflag, size = 0x8, scoped, tag = 'scoped memory for tpu_custom_call.1']
    #allocation6 [shape = 'u8[32768]{0}', space=vmem, size = 0x8000, scoped, tag = 'output window, operand 0']
    %7 = vsyncpa [#allocation4], 0
    %s8 = scalar_lea.sflag [#allocation4], 1
    %9 = vsyncpa %s8, 0
    %10 = vsyncpa [#allocation5], 0
    %s11 = scalar_lea.sflag [#allocation5], 1
    %12 = vsyncpa %s11, 0
    loop: start=0, step=1, limit=4
    $region2: #{tpu_custom_call.1} parent=1 // loop_pre_header
      _
    $region3: #{tpu_custom_call.1} parent=1 // loop_header
      %s14 = sphi 0, %s18
      %p15 = scmp.ge.s32.totalorder %s14, 4
      %s24 = sphi 0, %s26
      %s27 = sphi 0, %s24
      %s28 = sphi 0, %s27
      %s44 = sphi 0, %s28
      %s50 = sphi 0, %s52
      %s53 = sphi 0, %s50
      %s54 = sphi 0, %s53
      %s70 = sphi 0, %s54
      %s76 = sphi 0, %s78
      %s79 = sphi 0, %s76
      %s80 = sphi 0, %s79
      %s96 = sphi 0, %s80
    $region4: #{tpu_custom_call.1} parent=1 // loop_header_branch
      %17 = sbr.rel (%p15) target = $region8
    $region5: #{tpu_custom_call.1} parent=1 // loop_body
      %s19 = ssub.s32 %s14, 1
      %s20 = ssub.s32 %s14, 2
      %s21 = sadd.s32 %s14, 1
      %s22 = ssub.s32 %s14, %s21
      %p23 = scmp.eq.s32.totalorder %s22, 0
      %s25 = sadd.s32 %s24, 1
      %s26 = scalar_select %p23, %s24, %s25
      %p29 = pneg %p23
      %p30 = scmp.eq.s32.totalorder %s14, 1
      %p31 = por %p29, %p30
      %p32 = scmp.ne.s32.totalorder %s24, %s27
      %p33 = scmp.eq.s32.totalorder %s14, 0
      %p34 = por %p32, %p33
      %p35 = scmp.ne.s32.totalorder %s24, %s27
      %p36 = scmp.eq.s32.totalorder %s19, 1
      %p37 = por %p35, %p36
      %p38 = scmp.ne.s32.totalorder %s27, %s28
      %p39 = scmp.eq.s32.totalorder %s19, 0
      %p40 = por %p38, %p39
      %p41 = scmp.ne.s32.totalorder %s27, %s28
      %p42 = scmp.eq.s32.totalorder %s20, 1
      %p43 = por %p41, %p42
      %p45 = scmp.ne.s32.totalorder %s28, %s44
      %p46 = scmp.eq.s32.totalorder %s20, 0
      %p47 = por %p45, %p46
      %s48 = ssub.s32 %s14, %s21
      %p49 = scmp.eq.s32.totalorder %s48, 0
      %s51 = sadd.s32 %s50, 1
      %s52 = scalar_select %p49, %s50, %s51
      %p55 = pneg %p49
      %p56 = scmp.eq.s32.totalorder %s14, 1
      %p57 = por %p55, %p56
      %p58 = scmp.ne.s32.totalorder %s50, %s53
      %p59 = scmp.eq.s32.totalorder %s14, 0
      %p60 = por %p58, %p59
      %p61 = scmp.ne.s32.totalorder %s50, %s53
      %p62 = scmp.eq.s32.totalorder %s19, 1
      %p63 = por %p61, %p62
      %p64 = scmp.ne.s32.totalorder %s53, %s54
      %p65 = scmp.eq.s32.totalorder %s19, 0
      %p66 = por %p64, %p65
      %p67 = scmp.ne.s32.totalorder %s53, %s54
      %p68 = scmp.eq.s32.totalorder %s20, 1
      %p69 = por %p67, %p68
      %p71 = scmp.ne.s32.totalorder %s54, %s70
      %p72 = scmp.eq.s32.totalorder %s20, 0
      %p73 = por %p71, %p72
      %s74 = ssub.s32 %s14, %s21
      %p75 = scmp.eq.s32.totalorder %s74, 0
      %s77 = sadd.s32 %s76, 1
      %s78 = scalar_select %p75, %s76, %s77
      %p81 = pneg %p75
      %p82 = scmp.eq.s32.totalorder %s14, 1
      %p83 = por %p81, %p82
      %p84 = scmp.ne.s32.totalorder %s76, %s79
      %p85 = scmp.eq.s32.totalorder %s14, 0
      %p86 = por %p84, %p85
      %p87 = scmp.ne.s32.totalorder %s76, %s79
      %p88 = scmp.eq.s32.totalorder %s19, 1
      %p89 = por %p87, %p88
      %p90 = scmp.ne.s32.totalorder %s79, %s80
      %p91 = scmp.eq.s32.totalorder %s19, 0
      %p92 = por %p90, %p91
      %p93 = scmp.ne.s32.totalorder %s79, %s80
      %p94 = scmp.eq.s32.totalorder %s20, 1
      %p95 = por %p93, %p94
      %p97 = scmp.ne.s32.totalorder %s80, %s96
      %p98 = scmp.eq.s32.totalorder %s20, 0
      %p99 = por %p97, %p98
      %p100 = scmp.le.s32.totalorder 1, %s14
      %p101 = scmp.lt.s32.totalorder %s14, 3
      %p102 = pnand %p100, %p101
      %p103 = pneg %p102
      // Predicated region
      $region9: #{tpu_custom_call.1} parent=5 // pred_check
        _
      $region10: #{tpu_custom_call.1} parent=5 // pred_check_branch
        %105 = sbr.rel (%p102) target = $region12
      $region11: #{tpu_custom_call.1} parent=5 // pred_region
        %s106 = ssub.s32 %s14, 1
      $region12: #{tpu_custom_call.1} parent=5 // pred_fallthru
        _
      %p107 = scmp.lt.s32.totalorder %s14, 2
      // Predicated region
      $region13: #{tpu_custom_call.1} parent=5 // pred_check
        %p108 = pneg %p107
      $region14: #{tpu_custom_call.1} parent=5 // pred_check_branch
        %110 = sbr.rel (%p108) target = $region16
      $region15: #{tpu_custom_call.1} parent=5 // pred_region
        // Predicated region
        $region17: #{tpu_custom_call.1} parent=15 // pred_check
          %p111 = pneg %p34
        $region18: #{tpu_custom_call.1} parent=15 // pred_check_branch
          %113 = sbr.rel (%p111) target = $region20
        $region19: #{tpu_custom_call.1} parent=15 // pred_region
          %s114 = sand.u32 %s24, 1
          %s115 = sand.u32 %s24, 1
          %s116 = smul.addr %s115, 4
          %s117 = scalar_lea.vmem [#allocation2], %s116
          %s118 = smul.u32 2, %s14
          %s119 = scalar_lea.vmem %s0, %s118
          // Predicated region
          $region21: #{tpu_custom_call.1} parent=19 // pred_check
            _
          $region22: #{tpu_custom_call.1} parent=19 // pred_check_branch
            %121 = sbr.rel (0) target = $region24
          $region23: #{tpu_custom_call.1} parent=19 // pred_region
            // Predicated region
            $region25: #{tpu_custom_call.1} parent=23 // pred_check
              _
            $region26: #{tpu_custom_call.1} parent=23 // pred_check_branch
              %123 = sbr.rel target = $region28
            $region27: #{tpu_custom_call.1} parent=23 // pred_region
              // Predicated region
              $region40: #{tpu_custom_call.1} parent=27 // pred_check
                _
              $region41: #{tpu_custom_call.1} parent=27 // pred_check_branch
                %141 = sbr.rel (0) target = $region43
              $region42: #{tpu_custom_call.1} parent=27 // pred_region
                %s143 = ssub.s32 4, 1
                loop: start=0, step=1, limit=1
                $region44: #{tpu_custom_call.1} parent=42 // loop_pre_header
                  _
                $region45: #{tpu_custom_call.1} parent=42 // loop_header
                  %s145 = sphi 0, %s149
                  %p146 = scmp.ge.s32.totalorder %s145, 1
                  %s150 = sphi %s119, %s119
                  %s151 = sphi %s117, %s117
                $region46: #{tpu_custom_call.1} parent=42 // loop_header_branch
                  %148 = sbr.rel (%p146) target = $region50
                $region47: #{tpu_custom_call.1} parent=42 // loop_body
                  %v152 = vld [vmem:[%s150] sm:%s143]
                  %153 = vst [vmem:[%s151] sm:%s143] %v152
                  %v154 = vld [vmem:[%s150 + $0x4] sm:%s143]
                  %155 = vst [vmem:[%s151 + $0x2] sm:%s143] %v154
                $region48: #{tpu_custom_call.1} parent=42 // loop_footer
                  %s149 = sadd.s32 1, %s145
                $region49: #{tpu_custom_call.1} parent=42 // loop_footer_branch
                  %144 = sbr.rel target = $region45
                $region50: #{tpu_custom_call.1} parent=42 // loop_exit
                  _
              $region43: #{tpu_custom_call.1} parent=27 // pred_fallthru
                _
            $region28: #{tpu_custom_call.1} parent=23 // pred_fallthru
              _
            // Predicated region
            $region29: #{tpu_custom_call.1} parent=23 // pred_check
              _
            $region30: #{tpu_custom_call.1} parent=23 // pred_check_branch
              %125 = sbr.rel (0) target = $region32
            $region31: #{tpu_custom_call.1} parent=23 // pred_region
              %s127 = ssub.s32 4, 1
              loop: start=0, step=1, limit=1
              $region33: #{tpu_custom_call.1} parent=31 // loop_pre_header
                _
              $region34: #{tpu_custom_call.1} parent=31 // loop_header
                %s129 = sphi 0, %s133
                %p130 = scmp.ge.s32.totalorder %s129, 1
                %s134 = sphi %s119, %s119
                %s135 = sphi %s117, %s117
              $region35: #{tpu_custom_call.1} parent=31 // loop_header_branch
                %132 = sbr.rel (%p130) target = $region39
              $region36: #{tpu_custom_call.1} parent=31 // loop_body
                %v136 = vld [vmem:[%s134] sm:%s127]
                %137 = vst [vmem:[%s135] sm:%s127] %v136
                %v138 = vld [vmem:[%s134 + $0x4] sm:%s127]
                %139 = vst [vmem:[%s135 + $0x2] sm:%s127] %v138
              $region37: #{tpu_custom_call.1} parent=31 // loop_footer
                %s133 = sadd.s32 1, %s129
              $region38: #{tpu_custom_call.1} parent=31 // loop_footer_branch
                %128 = sbr.rel target = $region34
              $region39: #{tpu_custom_call.1} parent=31 // loop_exit
                _
            $region32: #{tpu_custom_call.1} parent=23 // pred_fallthru
              _
          $region24: #{tpu_custom_call.1} parent=19 // pred_fallthru
            _
          %156 = vnop
        $region20: #{tpu_custom_call.1} parent=15 // pred_fallthru
          _
        // Predicated region
        $region51: #{tpu_custom_call.1} parent=15 // pred_check
          %p157 = pneg %p60
        $region52: #{tpu_custom_call.1} parent=15 // pred_check_branch
          %159 = sbr.rel (%p157) target = $region54
        $region53: #{tpu_custom_call.1} parent=15 // pred_region
          #allocation8 [shape = 'u32[6]{0}', space=smem, size = 0x18, scoped, tag = 'DMA stride descriptor']
          %s160 = sand.u32 %s50, 1
          %s161 = scalar_lea.sflag [#allocation4], %s160
          %s162 = sand.u32 %s50, 1
          %s163 = smul.addr %s162, 32
          %s164 = scalar_lea.vmem [#allocation3], %s163
          %s165 = smul.u32 2, %s14
          %167 = vsyncadd %s161, 0
          %s168 = smul.addr %s165, 8
          %s169 = scalar_lea.hbm %s1, %s168
          %s171 = sshll.u32 1, 14
          %s172 = sxor.u32 4294967295, %s171
          %s174 = sld [smem:[#allocation0]]
          %s175 = sadd.s32 2, %s174
          %s177 = sshll.u32 7, 26
          %s178 = sxor.u32 4294967295, %s177
          %s179 = sand.u32 0, %s178
          %s180 = sshll.u32 %s175, 26
          %s181 = sor.u32 %s179, %s180
          %s182 = sshll.u32 %s169, 4
          %s183 = int_to_ptr.hbm [resolvable:$true] %s182
          %s184 = sshll.u32 %s164, 4
          %s185 = int_to_ptr.vmem [resolvable:$true] %s184
          %191 = sst [smem:[#allocation8]] 512
          %s192 = scalar_lea.smem [#allocation8], 1
          %193 = sst [smem:[%s192]] 256
          %s194 = scalar_lea.smem [#allocation8], 2
          %195 = sst [smem:[%s194]] 2
          %s196 = scalar_lea.smem [#allocation8], 3
          %197 = sst [smem:[%s196]] 128
          %s198 = scalar_lea.smem [#allocation8], 4
          %199 = sst [smem:[%s198]] 128
          %s200 = scalar_lea.smem [#allocation8], 5
          %201 = sst [smem:[%s200]] 8
          %203 = dma.general %s183, 512, %s185, %s161, [#allocation7], [#allocation8], %s181, 0
        $region54: #{tpu_custom_call.1} parent=15 // pred_fallthru
          _
      $region16: #{tpu_custom_call.1} parent=5 // pred_fallthru
        _
      %p204 = scmp.le.s32.totalorder 1, %s14
      %p205 = scmp.lt.s32.totalorder %s14, 3
      %p206 = pnand %p204, %p205
      %p207 = pneg %p206
      // Predicated region
      $region55: #{tpu_custom_call.1} parent=5 // pred_check
        _
      $region56: #{tpu_custom_call.1} parent=5 // pred_check_branch
        %209 = sbr.rel (%p206) target = $region58
      $region57: #{tpu_custom_call.1} parent=5 // pred_region
        %s210 = ssub.s32 %s14, 1
        %s211 = sand.u32 %s27, 1
        %s212 = sand.u32 %s27, 1
        %s213 = smul.addr %s212, 4
        %s214 = scalar_lea.vmem [#allocation2], %s213
        // Predicated region
        $region59: #{tpu_custom_call.1} parent=57 // pred_check
          %p215 = pneg %p40
        $region60: #{tpu_custom_call.1} parent=57 // pred_check_branch
          %217 = sbr.rel (%p215) target = $region62
        $region61: #{tpu_custom_call.1} parent=57 // pred_region
          _
        $region62: #{tpu_custom_call.1} parent=57 // pred_fallthru
          _
        %s218 = sand.u32 %s53, 1
        %s219 = scalar_lea.sflag [#allocation4], %s218
        %s220 = sand.u32 %s53, 1
        %s221 = smul.addr %s220, 32
        %s222 = scalar_lea.vmem [#allocation3], %s221
        // Predicated region
        $region63: #{tpu_custom_call.1} parent=57 // pred_check
          %p223 = pneg %p66
        $region64: #{tpu_custom_call.1} parent=57 // pred_check_branch
          %225 = sbr.rel (%p223) target = $region66
        $region65: #{tpu_custom_call.1} parent=57 // pred_region
          %227 = dma.done %s219, 512
        $region66: #{tpu_custom_call.1} parent=57 // pred_fallthru
          _
        %s228 = sand.u32 %s27, 1
        %s229 = sand.u32 %s27, 1
        %s230 = smul.addr %s229, 4
        %s231 = scalar_lea.vmem [#allocation2], %s230
        %p232 = pneg %p40
        %p233 = pneg %p37
        %s234 = sand.u32 %s53, 1
        %s235 = scalar_lea.sflag [#allocation4], %s234
        %s236 = sand.u32 %s53, 1
        %s237 = smul.addr %s236, 32
        %s238 = scalar_lea.vmem [#allocation3], %s237
        %p239 = pneg %p66
        %p240 = pneg %p63
        %p241 = pneg %p92
        %p242 = pneg %p89
        %s243 = sand.u32 %s79, 1
        %s244 = scalar_lea.sflag [#allocation5], %s243
        %s245 = sand.u32 %s79, 1
        %s246 = smul.addr %s245, 32
        %s247 = scalar_lea.vmem [#allocation6], %s246
        %s248 = smul.u32 2, %s19
        %s249 = smul.u32 2, %s19
        %s250 = smul.u32 2, %s19
        %v251 = vld [vmem:[%s222] sm:$0xff]
        %v252 = vld [vmem:[%s222 + $0x8] sm:$0xff]
        %v253 = vld [vmem:[%s222 + $0x10] sm:$0xff]
        %v254 = vld [vmem:[%s222 + $0x18] sm:$0xff]
        %259 = vrot.lane.b32.xlu0 %v251, 112
        %v260 = vpop.permute.xlu0 %259
        %261 = vrot.lane.b32.xlu0 %v252, 112
        %v262 = vpop.permute.xlu0 %261
        %263 = vrot.lane.b32.xlu0 %v253, 112
        %v264 = vpop.permute.xlu0 %263
        %265 = vrot.lane.b32.xlu0 %v254, 112
        %v266 = vpop.permute.xlu0 %265
        %v271 = vmax.f32 %v251, %v260
        %v272 = vmax.f32 %v252, %v262
        %v273 = vmax.f32 %v253, %v264
        %v274 = vmax.f32 %v254, %v266
        %279 = vrot.lane.b32.xlu0 %v271, 127
        %v280 = vpop.permute.xlu0 %279
        %281 = vrot.lane.b32.xlu0 %v272, 127
        %v282 = vpop.permute.xlu0 %281
        %283 = vrot.lane.b32.xlu0 %v273, 127
        %v284 = vpop.permute.xlu0 %283
        %285 = vrot.lane.b32.xlu0 %v274, 127
        %v286 = vpop.permute.xlu0 %285
        %291 = vrot.lane.b32.xlu0 %v271, 15
        %v292 = vpop.permute.xlu0 %291
        %293 = vrot.lane.b32.xlu0 %v272, 15
        %v294 = vpop.permute.xlu0 %293
        %295 = vrot.lane.b32.xlu0 %v273, 15
        %v296 = vpop.permute.xlu0 %295
        %297 = vrot.lane.b32.xlu0 %v274, 15
        %v298 = vpop.permute.xlu0 %297
        %vm303 = vcmask 121856
        %v304 = vsel %vm303, %v280, %v292
        %v305 = vsel %vm303, %v282, %v294
        %v306 = vsel %vm303, %v284, %v296
        %v307 = vsel %vm303, %v286, %v298
        %v308 = vmax.f32 %v271, %v304
        %v309 = vmax.f32 %v272, %v305
        %v310 = vmax.f32 %v273, %v306
        %v311 = vmax.f32 %v274, %v307
        %v312 = vlaneseq
        %v313 = vand.u32 %v312, 127
        %v314 = vand.u32 %v313, 3
        %vm315 = vcmp.ge.s32.totalorder %v314, 1
        %vm316 = vcmp.lt.s32.totalorder %v314, 2
        %vm317 = vmand %vm315, %vm316
        %322 = vrot.lane.b32.xlu0 %v308, 127
        %v323 = vpop.permute.xlu0 %322
        %324 = vrot.lane.b32.xlu0 %v309, 127
        %v325 = vpop.permute.xlu0 %324
        %326 = vrot.lane.b32.xlu0 %v310, 127
        %v327 = vpop.permute.xlu0 %326
        %328 = vrot.lane.b32.xlu0 %v311, 127
        %v329 = vpop.permute.xlu0 %328
        %334 = vrot.lane.b32.xlu0 %v308, 15
        %v335 = vpop.permute.xlu0 %334
        %336 = vrot.lane.b32.xlu0 %v309, 15
        %v337 = vpop.permute.xlu0 %336
        %338 = vrot.lane.b32.xlu0 %v310, 15
        %v339 = vpop.permute.xlu0 %338
        %340 = vrot.lane.b32.xlu0 %v311, 15
        %v341 = vpop.permute.xlu0 %340
        %v346 = vsel %vm303, %v323, %v335
        %v347 = vsel %vm303, %v325, %v337
        %v348 = vsel %vm303, %v327, %v339
        %v349 = vsel %vm303, %v329, %v341
        %v350 = vsel %vm317, 1, 0
        %vm351 = vcmp.eq.s32.totalorder %v350, 1
        %v352 = vsel %vm351, %v346, %v308
        %v353 = vsel %vm351, %v347, %v309
        %v354 = vsel %vm351, %v348, %v310
        %v355 = vsel %vm351, %v349, %v311
        %v356 = vand.u32 %v313, 7
        %vm357 = vcmp.ge.s32.totalorder %v356, 2
        %vm358 = vcmp.lt.s32.totalorder %v356, 4
        %vm359 = vmand %vm357, %vm358
        %364 = vrot.lane.b32.xlu0 %v352, 126
        %v365 = vpop.permute.xlu0 %364
        %366 = vrot.lane.b32.xlu0 %v353, 126
        %v367 = vpop.permute.xlu0 %366
        %368 = vrot.lane.b32.xlu0 %v354, 126
        %v369 = vpop.permute.xlu0 %368
        %370 = vrot.lane.b32.xlu0 %v355, 126
        %v371 = vpop.permute.xlu0 %370
        %376 = vrot.lane.b32.xlu0 %v352, 14
        %v377 = vpop.permute.xlu0 %376
        %378 = vrot.lane.b32.xlu0 %v353, 14
        %v379 = vpop.permute.xlu0 %378
        %380 = vrot.lane.b32.xlu0 %v354, 14
        %v381 = vpop.permute.xlu0 %380
        %382 = vrot.lane.b32.xlu0 %v355, 14
        %v383 = vpop.permute.xlu0 %382
        %vm388 = vcmask 113664
        %v389 = vsel %vm388, %v365, %v377
        %v390 = vsel %vm388, %v367, %v379
        %v391 = vsel %vm388, %v369, %v381
        %v392 = vsel %vm388, %v371, %v383
        %v393 = vsel %vm359, 1, 0
        %vm394 = vcmp.eq.s32.totalorder %v393, 1
        %v395 = vsel %vm394, %v389, %v352
        %v396 = vsel %vm394, %v390, %v353
        %v397 = vsel %vm394, %v391, %v354
        %v398 = vsel %vm394, %v392, %v355
        %v399 = vand.u32 %v313, 15
        %vm400 = vcmp.ge.s32.totalorder %v399, 4
        %vm401 = vcmp.lt.s32.totalorder %v399, 8
        %vm402 = vmand %vm400, %vm401
        %407 = vrot.lane.b32.xlu0 %v395, 124
        %v408 = vpop.permute.xlu0 %407
        %409 = vrot.lane.b32.xlu0 %v396, 124
        %v410 = vpop.permute.xlu0 %409
        %411 = vrot.lane.b32.xlu0 %v397, 124
        %v412 = vpop.permute.xlu0 %411
        %413 = vrot.lane.b32.xlu0 %v398, 124
        %v414 = vpop.permute.xlu0 %413
        %419 = vrot.lane.b32.xlu0 %v395, 12
        %v420 = vpop.permute.xlu0 %419
        %421 = vrot.lane.b32.xlu0 %v396, 12
        %v422 = vpop.permute.xlu0 %421
        %423 = vrot.lane.b32.xlu0 %v397, 12
        %v424 = vpop.permute.xlu0 %423
        %425 = vrot.lane.b32.xlu0 %v398, 12
        %v426 = vpop.permute.xlu0 %425
        %vm431 = vcmask 97280
        %v432 = vsel %vm431, %v408, %v420
        %v433 = vsel %vm431, %v410, %v422
        %v434 = vsel %vm431, %v412, %v424
        %v435 = vsel %vm431, %v414, %v426
        %v436 = vsel %vm402, 1, 0
        %vm437 = vcmp.eq.s32.totalorder %v436, 1
        %v438 = vsel %vm437, %v432, %v395
        %v439 = vsel %vm437, %v433, %v396
        %v440 = vsel %vm437, %v434, %v397
        %v441 = vsel %vm437, %v435, %v398
        %vm442 = vcmask 64512
        %v443 = vsel %vm442, %v438, 0.0
        %444 = vadd.xlane.f32.xlu0 %v443
        %v445 = vpop.xlane.xlu0 %444
        %v446 = vsel %vm442, %v439, 0.0
        %447 = vadd.xlane.f32.xlu0 %v446
        %v448 = vpop.xlane.xlu0 %447
        %v449 = vsel %vm442, %v440, 0.0
        %450 = vadd.xlane.f32.xlu0 %v449
        %v451 = vpop.xlane.xlu0 %450
        %v452 = vsel %vm442, %v441, 0.0
        %453 = vadd.xlane.f32.xlu0 %v452
        %v454 = vpop.xlane.xlu0 %453
        %v455 = vrot.slane %v445, 4
        %v456 = vadd.f32 %v445, %v455
        %v457 = vrot.slane %v456, 2
        %v458 = vadd.f32 %v456, %v457
        %v459 = vrot.slane %v458, 1
        %v460 = vadd.f32 %v458, %v459
        %v461 = vrot.slane %v448, 4
        %v462 = vadd.f32 %v448, %v461
        %v463 = vrot.slane %v462, 2
        %v464 = vadd.f32 %v462, %v463
        %v465 = vrot.slane %v464, 1
        %v466 = vadd.f32 %v464, %v465
        %v467 = vrot.slane %v451, 4
        %v468 = vadd.f32 %v451, %v467
        %v469 = vrot.slane %v468, 2
        %v470 = vadd.f32 %v468, %v469
        %v471 = vrot.slane %v470, 1
        %v472 = vadd.f32 %v470, %v471
        %v473 = vrot.slane %v454, 4
        %v474 = vadd.f32 %v454, %v473
        %v475 = vrot.slane %v474, 2
        %v476 = vadd.f32 %v474, %v475
        %v477 = vrot.slane %v476, 1
        %v478 = vadd.f32 %v476, %v477
        %v479 = vadd.f32 %v460, %v472
        %v480 = vadd.f32 %v466, %v478
        %v481 = vmul.f32 %v479, 0.0078125
        %v482 = vmul.f32 %v480, 0.0078125
        %v483 = vsub.f32 %v438, %v481
        %v484 = vsub.f32 %v439, %v482
        %v485 = vsub.f32 %v440, %v481
        %v486 = vsub.f32 %v441, %v482
        %v487 = vmul.f32 %v483, %v483
        %v488 = vmul.f32 %v484, %v484
        %v489 = vmul.f32 %v485, %v485
        %v490 = vmul.f32 %v486, %v486
        %v491 = vsel %vm442, %v487, 0.0
        %492 = vadd.xlane.f32.xlu0 %v491
        %v493 = vpop.xlane.xlu0 %492
        %v494 = vsel %vm442, %v488, 0.0
        %495 = vadd.xlane.f32.xlu0 %v494
        %v496 = vpop.xlane.xlu0 %495
        %v497 = vsel %vm442, %v489, 0.0
        %498 = vadd.xlane.f32.xlu0 %v497
        %v499 = vpop.xlane.xlu0 %498
        %v500 = vsel %vm442, %v490, 0.0
        %501 = vadd.xlane.f32.xlu0 %v500
        %v502 = vpop.xlane.xlu0 %501
        %v503 = vrot.slane %v493, 4
        %v504 = vadd.f32 %v493, %v503
        %v505 = vrot.slane %v504, 2
        %v506 = vadd.f32 %v504, %v505
        %v507 = vrot.slane %v506, 1
        %v508 = vadd.f32 %v506, %v507
        %v509 = vrot.slane %v496, 4
        %v510 = vadd.f32 %v496, %v509
        %v511 = vrot.slane %v510, 2
        %v512 = vadd.f32 %v510, %v511
        %v513 = vrot.slane %v512, 1
        %v514 = vadd.f32 %v512, %v513
        %v515 = vrot.slane %v499, 4
        %v516 = vadd.f32 %v499, %v515
        %v517 = vrot.slane %v516, 2
        %v518 = vadd.f32 %v516, %v517
        %v519 = vrot.slane %v518, 1
        %v520 = vadd.f32 %v518, %v519
        %v521 = vrot.slane %v502, 4
        %v522 = vadd.f32 %v502, %v521
        %v523 = vrot.slane %v522, 2
        %v524 = vadd.f32 %v522, %v523
        %v525 = vrot.slane %v524, 1
        %v526 = vadd.f32 %v524, %v525
        %v527 = vadd.f32 %v508, %v520
        %v528 = vadd.f32 %v514, %v526
        %v529 = vmul.f32 %v527, 0.0078125
        %v530 = vmul.f32 %v528, 0.0078125
        %v531 = vld [vmem:[%s214] sm:$0x1]
        %v532 = vld [vmem:[%s214 + $0x1] sm:$0x1]
        %v533 = vld [vmem:[%s214 + $0x2] sm:$0x1]
        %v534 = vld [vmem:[%s214 + $0x3] sm:$0x1]
        %v535 = vadd.f32 %v529, 1e-05
        %v536 = vadd.f32 %v530, 1e-05
        %v537 = vrsqrt.pop %v535
        %v538 = vmul.f32 %v537, %v535
        %v539 = vmul.f32 %v538, %v537
        %v540 = vmul.f32 0.5, %v539
        %v541 = vsub.f32 1.5, %v540
        %v542 = vmul.f32 %v537, %v541
        %vm543 = vweird.f32 %v535
        %vm544 = vweird.f32 %v537
        %vm545 = vmor %vm543, %vm544
        %v546 = vsel %vm545, %v537, %v542
        %v547 = vrsqrt.pop %v536
        %v548 = vmul.f32 %v547, %v536
        %v549 = vmul.f32 %v548, %v547
        %v550 = vmul.f32 0.5, %v549
        %v551 = vsub.f32 1.5, %v550
        %v552 = vmul.f32 %v547, %v551
        %vm553 = vweird.f32 %v536
        %vm554 = vweird.f32 %v547
        %vm555 = vmor %vm553, %vm554
        %v556 = vsel %vm555, %v547, %v552
        %v557 = vmul.f32 %v531, %v546
        %v558 = vmul.f32 %v532, %v556
        %v561 = vperm.slane %v557, 0
        %v562 = vperm.slane %v558, 0
        %563 = vset.pattern.permute.xlu0 0
        %564 = vperm.xlu0 %563, %v561
        %v565 = vpop.permute.xlu0 %564
        %567 = vset.pattern.permute.xlu0 0
        %568 = vperm.xlu0 %567, %v562
        %v569 = vpop.permute.xlu0 %568
        %v571 = vmul.f32 %v483, %v565
        %v572 = vmul.f32 %v484, %v569
        %v573 = vmul.f32 %v485, %v565
        %v574 = vmul.f32 %v486, %v569
        %v577 = vperm.slane %v533, 0
        %v578 = vperm.slane %v534, 0
        %579 = vset.pattern.permute.xlu0 0
        %580 = vperm.xlu0 %579, %v577
        %v581 = vpop.permute.xlu0 %580
        %583 = vset.pattern.permute.xlu0 0
        %584 = vperm.xlu0 %583, %v578
        %v585 = vpop.permute.xlu0 %584
        %v587 = vadd.f32 %v571, %v581
        %v588 = vadd.f32 %v572, %v585
        %v589 = vadd.f32 %v573, %v581
        %v590 = vadd.f32 %v574, %v585
        %v591 = vmax.f32 %v587, 0.0
        %v592 = vmax.f32 %v588, 0.0
        %v593 = vmax.f32 %v589, 0.0
        %v594 = vmax.f32 %v590, 0.0
        %595 = vst.msk [vmem:[%s247] sm:$0xff] %vm442, %v591
        %596 = vst.msk [vmem:[%s247 + $0x8] sm:$0xff] %vm442, %v592
        %597 = vst.msk [vmem:[%s247 + $0x10] sm:$0xff] %vm442, %v593
        %598 = vst.msk [vmem:[%s247 + $0x18] sm:$0xff] %vm442, %v594
        %s599 = sand.u32 %s79, 1
        %s600 = scalar_lea.sflag [#allocation5], %s599
        %s601 = sand.u32 %s79, 1
        %s602 = smul.addr %s601, 32
        %s603 = scalar_lea.vmem [#allocation6], %s602
        // Predicated region
        $region67: #{tpu_custom_call.1} parent=57 // pred_check
          %p604 = pneg %p89
        $region68: #{tpu_custom_call.1} parent=57 // pred_check_branch
          %606 = sbr.rel (%p604) target = $region70
        $region69: #{tpu_custom_call.1} parent=57 // pred_region
          #allocation10 [shape = 'u32[6]{0}', space=smem, size = 0x18, scoped, tag = 'DMA stride descriptor']
          %s607 = smul.u32 2, %s19
          %609 = vsyncadd %s600, 0
          %s610 = smul.addr %s607, 8
          %s611 = scalar_lea.hbm %s2, %s610
          %s613 = sshll.u32 1, 14
          %s614 = sxor.u32 4294967295, %s613
          %s617 = sshll.u32 7, 18
          %s618 = sxor.u32 4294967295, %s617
          %s619 = sand.u32 0, %s618
          %s621 = sor.u32 %s619, 0
          %s622 = sshll.u32 %s603, 4
          %s623 = int_to_ptr.vmem [resolvable:$true] %s622
          %s624 = sshll.u32 %s611, 4
          %s625 = int_to_ptr.hbm [resolvable:$true] %s624
          %631 = sst [smem:[#allocation10]] 256
          %s632 = scalar_lea.smem [#allocation10], 1
          %633 = sst [smem:[%s632]] 512
          %s634 = scalar_lea.smem [#allocation10], 2
          %635 = sst [smem:[%s634]] 2
          %s636 = scalar_lea.smem [#allocation10], 3
          %637 = sst [smem:[%s636]] 128
          %s638 = scalar_lea.smem [#allocation10], 4
          %639 = sst [smem:[%s638]] 128
          %s640 = scalar_lea.smem [#allocation10], 5
          %641 = sst [smem:[%s640]] 8
          %643 = dma.general %s623, 512, %s625, %s600, [#allocation9], [#allocation10], %s621, 0
        $region70: #{tpu_custom_call.1} parent=57 // pred_fallthru
          _
      $region58: #{tpu_custom_call.1} parent=5 // pred_fallthru
        _
      %p644 = scmp.le.s32.totalorder 2, %s14
      // Predicated region
      $region71: #{tpu_custom_call.1} parent=5 // pred_check
        %p645 = pneg %p644
      $region72: #{tpu_custom_call.1} parent=5 // pred_check_branch
        %647 = sbr.rel (%p645) target = $region74
      $region73: #{tpu_custom_call.1} parent=5 // pred_region
        %s648 = ssub.s32 %s14, 2
        // Predicated region
        $region75: #{tpu_custom_call.1} parent=73 // pred_check
          %p649 = pneg %p95
        $region76: #{tpu_custom_call.1} parent=73 // pred_check_branch
          %651 = sbr.rel (%p649) target = $region78
        $region77: #{tpu_custom_call.1} parent=73 // pred_region
          %s652 = sand.u32 %s80, 1
          %s653 = scalar_lea.sflag [#allocation5], %s652
          %s654 = sand.u32 %s80, 1
          %s655 = smul.addr %s654, 32
          %s656 = scalar_lea.vmem [#allocation6], %s655
          %658 = dma.done %s653, 512
        $region78: #{tpu_custom_call.1} parent=73 // pred_fallthru
          _
      $region74: #{tpu_custom_call.1} parent=5 // pred_fallthru
        _
    $region6: #{tpu_custom_call.1} parent=1 // loop_footer
      %s18 = sadd.s32 1, %s14
    $region7: #{tpu_custom_call.1} parent=1 // loop_footer_branch
      %13 = sbr.rel target = $region3
    $region8: #{tpu_custom_call.1} parent=1 // loop_exit
      _
    %659 = vsyncpa [#allocation4], 1
    %s660 = scalar_lea.sflag [#allocation4], 1
    %661 = vsyncpa %s660, 1
    %662 = vsyncpa [#allocation5], 1
    %s663 = scalar_lea.sflag [#allocation5], 1
    %664 = vsyncpa %s663, 1

</llo_original>
